<compile_context>
chip_gen: v7x
topology: tpu7x:2x2x1
jax: 0.10.0
libtpu: 0.0.40
codegen_flags: <defaults>
</compile_context>

<pallas_src>
import jax
import jax.numpy as jnp
from jax.experimental import pallas as pl
from jax.experimental.pallas import tpu as pltpu


def _round_up(n, m):
    return ((n + m - 1) // m) * m


def concept_clip_kernel(x_ref, ww_ref, bw_ref, m_ref, base_ref, out_ref):
    # x is a single scalar in SMEM; Linear(1, K) is scalar*vector + bias (VPU).
    x_s = x_ref[0, 0]
    wx = x_s * ww_ref[...] + bw_ref[...]                       # (KP, 1)   VPU
    # delta[c] = sum_k wx[k] * M[k, c]  with M = v_clip @ wc.T (pre-folded).
    # VPU broadcast-multiply + XLU sublane reduce -- no MXU needed.
    delta = jnp.sum(wx * m_ref[...], axis=0, keepdims=True)    # (1, CP)
    # base_logits = embedding @ wc.T + bc was folded on the host (frozen).
    out_ref[...] = base_ref[...] + delta                       # lane-dense store


def prepare_concept_clip_params(ww, bw, v_clip, embedding, wc, bc, *,
                                row_tile=128):
    """One-time (weight-load-time) preparation.

    Pre-folds the frozen tensors:
        base_logits = embedding @ wc.T + bc     (N, C)
        M           = v_clip   @ wc.T           (K, C)
    and pads everything to TPU-friendly (sublane=8, lane=128) shapes so the
    runtime kernel only issues full, unmasked vector stores.  All transposes /
    casts happen here exactly once, never per forward call.
    """
    f32 = jnp.float32
    ww = jnp.asarray(ww, f32).reshape(-1, 1)        # (K, 1)  trainable
    bw = jnp.asarray(bw, f32).reshape(-1, 1)        # (K, 1)  trainable
    v_clip = jnp.asarray(v_clip, f32)               # (K, D)  frozen
    embedding = jnp.asarray(embedding, f32)         # (N, D)  frozen
    wc = jnp.asarray(wc, f32)                       # (C, D)  frozen
    bc = jnp.asarray(bc, f32)                       # (C,)    frozen

    n_rows = embedding.shape[0]
    n_concepts = v_clip.shape[0]
    n_cls = wc.shape[0]

    base = embedding @ wc.T + bc[None, :]           # (N, C)
    m = v_clip @ wc.T                               # (K, C)

    kp = _round_up(n_concepts, 8)
    cp = _round_up(n_cls, 128)
    tm = min(row_tile, _round_up(n_rows, 8))
    np_ = _round_up(n_rows, tm)

    return dict(
        ww=jnp.pad(ww, ((0, kp - n_concepts), (0, 0))),
        bw=jnp.pad(bw, ((0, kp - n_concepts), (0, 0))),
        m=jnp.pad(m, ((0, kp - n_concepts), (0, cp - n_cls))),
        base=jnp.pad(base, ((0, np_ - n_rows), (0, cp - n_cls))),
        n_rows=n_rows, n_cls=n_cls, row_tile=tm,
    )


def concept_clip_forward(x, params):
    """Runtime forward.  x: (1, 1) scalar input to the Linear(1, K) layer."""
    ww_p, bw_p = params["ww"], params["bw"]
    m_p, base_p = params["m"], params["base"]
    n_rows, n_cls, tm = params["n_rows"], params["n_cls"], params["row_tile"]
    np_, cp = base_p.shape
    kp = m_p.shape[0]

    x2 = x.reshape(1, 1).astype(jnp.float32)

    out_p = pl.pallas_call(
        concept_clip_kernel,
        out_shape=jax.ShapeDtypeStruct((np_, cp), jnp.float32),
        grid_spec=pltpu.PrefetchScalarGridSpec(
            num_scalar_prefetch=0,
            grid=(np_ // tm,),
            in_specs=[
                # scalar x -> SMEM, read on the scalar path
                pl.BlockSpec((1, 1), lambda i: (0, 0),
                             memory_space=pltpu.MemorySpace.SMEM),
                # tiny trainable Linear(1, K) params, resident in VMEM
                pl.BlockSpec((kp, 1), lambda i: (0, 0)),
                pl.BlockSpec((kp, 1), lambda i: (0, 0)),
                # pre-folded M = v_clip @ wc.T, resident in VMEM
                pl.BlockSpec((kp, cp), lambda i: (0, 0)),
                # pre-folded base_logits, tiled over rows
                pl.BlockSpec((tm, cp), lambda i: (i, 0)),
            ],
            out_specs=pl.BlockSpec((tm, cp), lambda i: (i, 0)),
        ),
        compiler_params=pltpu.CompilerParams(
            dimension_semantics=("parallel",)),
    )(x2, ww_p, bw_p, m_p, base_p)

    return out_p[:n_rows, :n_cls]


def reference_forward(x, ww, bw, v_clip, embedding, wc, bc):
    wx = x @ ww.T + bw                                      # (1, K)
    delta = jnp.tensordot(wx, v_clip[None, :, :], axes=2)   # (D,)
    h = embedding + delta
    return h @ wc.T + bc


if __name__ == "__main__":
    # Small, deterministic synthetic shapes consistent with the module:
    #   K = number of concepts (v_clip.shape[0]), D = CLIP embedding dim,
    #   C = number of classes. x is a single scalar knob of shape (1, 1).
    K, D, C = 8, 32, 4

    key = jax.random.PRNGKey(0)
    kx, kww, kbw, kv, kemb, kwc, kbc = jax.random.split(key, 7)

    x = jax.random.normal(kx, (1, 1), dtype=jnp.float32)
    ww = jax.random.normal(kww, (K, 1), dtype=jnp.float32) * 0.5      # Linear(1, K).weight
    bw = jax.random.normal(kbw, (K,), dtype=jnp.float32) * 0.1        # Linear(1, K).bias
    v_clip = jax.random.normal(kv, (K, D), dtype=jnp.float32)         # concept directions
    embedding = jax.random.normal(kemb, (1, D), dtype=jnp.float32)    # frozen CLIP embedding
    wc = jax.random.normal(kwc, (C, D), dtype=jnp.float32) * 0.2      # classifier.linear.weight
    bc = jax.random.normal(kbc, (C,), dtype=jnp.float32) * 0.1        # classifier.linear.bias

    # One-time weight preparation (frozen-term folding + padding), then forward.
    params = prepare_concept_clip_params(ww, bw, v_clip, embedding, wc, bc)
    out = concept_clip_forward(x, params)
    out = jax.block_until_ready(out)

    ref = reference_forward(x, ww, bw, v_clip, embedding, wc, bc)
    assert out.shape == (1, C), out.shape
    assert jnp.allclose(out, ref, atol=1e-4, rtol=1e-4), (out, ref)

    print("KERNEL_OK")
</pallas_src>

<mosaic_0001>
module attributes {stable_mosaic.version = 11 : i64} {
  func.func @concept_clip_kernel(%arg0: i32, %arg1: memref<1x1xf32, #tpu.memory_space<smem>>, %arg2: memref<8x1xf32, #tpu.memory_space<vmem>>, %arg3: memref<8x1xf32, #tpu.memory_space<vmem>>, %arg4: memref<8x128xf32, #tpu.memory_space<vmem>>, %arg5: memref<8x128xf32, #tpu.memory_space<vmem>>, %arg6: memref<8x128xf32, #tpu.memory_space<vmem>>) attributes {dimension_semantics = [#tpu.dimension_semantics<parallel>], iteration_bounds = array<i64: 1>, scalar_prefetch = 0 : i64, scratch_operands = 0 : i64, tpu.core_type = #tpu.core_type<tc>, window_params = [{transform_indices = @transform_0, window_bounds = array<i64: 1, 1>}, {pipeline_mode = #tpu.pipeline_mode<synchronous>, transform_indices = @transform_1, window_bounds = array<i64: 8, 1>}, {pipeline_mode = #tpu.pipeline_mode<synchronous>, transform_indices = @transform_2, window_bounds = array<i64: 8, 1>}, {pipeline_mode = #tpu.pipeline_mode<synchronous>, transform_indices = @transform_3, window_bounds = array<i64: 8, 128>}, {transform_indices = @transform_4, window_bounds = array<i64: 8, 128>}, {transform_indices = @transform_5, window_bounds = array<i64: 8, 128>}]} {
    %c0 = arith.constant 0 : index
    %c0_0 = arith.constant 0 : index
    %0 = memref.load %arg1[%c0, %c0_0] : memref<1x1xf32, #tpu.memory_space<smem>>
    %c0_1 = arith.constant 0 : index
    %c0_2 = arith.constant 0 : index
    %1 = vector.load %arg2[%c0_1, %c0_2] : memref<8x1xf32, #tpu.memory_space<vmem>>, vector<8x1xf32>
    %2 = vector.broadcast %0 : f32 to vector<8x1xf32>
    %3 = arith.mulf %2, %1 : vector<8x1xf32>
    %c0_3 = arith.constant 0 : index
    %c0_4 = arith.constant 0 : index
    %4 = vector.load %arg3[%c0_3, %c0_4] : memref<8x1xf32, #tpu.memory_space<vmem>>, vector<8x1xf32>
    %5 = arith.addf %3, %4 : vector<8x1xf32>
    %c0_5 = arith.constant 0 : index
    %c0_6 = arith.constant 0 : index
    %6 = vector.load %arg4[%c0_5, %c0_6] : memref<8x128xf32, #tpu.memory_space<vmem>>, vector<8x128xf32>
    %7 = vector.broadcast %5 : vector<8x1xf32> to vector<8x128xf32>
    %8 = arith.mulf %7, %6 : vector<8x128xf32>
    %cst = arith.constant dense<0.000000e+00> : vector<128xf32>
    %9 = vector.multi_reduction <add>, %8, %cst [0] : vector<8x128xf32> to vector<128xf32>
    %10 = vector.shape_cast %9 : vector<128xf32> to vector<1x128xf32>
    %c0_7 = arith.constant 0 : index
    %c0_8 = arith.constant 0 : index
    %11 = vector.load %arg5[%c0_7, %c0_8] : memref<8x128xf32, #tpu.memory_space<vmem>>, vector<8x128xf32>
    %12 = vector.broadcast %10 : vector<1x128xf32> to vector<8x128xf32>
    %13 = arith.addf %11, %12 : vector<8x128xf32>
    %c0_9 = arith.constant 0 : index
    %c0_10 = arith.constant 0 : index
    %14 = vector.load %arg6[%c0_9, %c0_10] : memref<8x128xf32, #tpu.memory_space<vmem>>, vector<8x128xf32>
    tpu.vector_store %arg6[%c0_9, %c0_10], %13 {strides = array<i32>} : memref<8x128xf32, #tpu.memory_space<vmem>>, vector<8x128xf32>,
    return
  }
  func.func @transform_0(%arg0: i32) -> (i32, i32) {
    %c0_i32 = arith.constant 0 : i32
    %c0_i32_0 = arith.constant 0 : i32
    %c0_i32_1 = arith.constant 0 : i32
    return %c0_i32, %c0_i32_0 : i32, i32
  }
  func.func @transform_1(%arg0: i32) -> (i32, i32) {
    %c0_i32 = arith.constant 0 : i32
    %c0_i32_0 = arith.constant 0 : i32
    %c0_i32_1 = arith.constant 0 : i32
    return %c0_i32, %c0_i32_0 : i32, i32
  }
  func.func @transform_2(%arg0: i32) -> (i32, i32) {
    %c0_i32 = arith.constant 0 : i32
    %c0_i32_0 = arith.constant 0 : i32
    %c0_i32_1 = arith.constant 0 : i32
    return %c0_i32, %c0_i32_0 : i32, i32
  }
  func.func @transform_3(%arg0: i32) -> (i32, i32) {
    %c0_i32 = arith.constant 0 : i32
    %c0_i32_0 = arith.constant 0 : i32
    %c0_i32_1 = arith.constant 0 : i32
    return %c0_i32, %c0_i32_0 : i32, i32
  }
  func.func @transform_4(%arg0: i32) -> (i32, i32) {
    %c0_i32 = arith.constant 0 : i32
    %c0_i32_0 = arith.constant 0 : i32
    return %arg0, %c0_i32 : i32, i32
  }
  func.func @transform_5(%arg0: i32) -> (i32, i32) {
    %c0_i32 = arith.constant 0 : i32
    %c0_i32_0 = arith.constant 0 : i32
    return %arg0, %c0_i32 : i32, i32
  }
}

</mosaic_0001>

<llo_original>
// kernel: tpu_custom_call.1
$region0: #{tpu_custom_call.1}
  #allocation0 [shape = 'u32[]', space=smem, size = 0x4, offset = 0x4, fixed_abs, tag = 'smem constant byte address 0x4 - core index']
  #allocation1 [shape = 'u32[144,128]{1,0:T(1,128)}', space=vmem, size = 0x12000, scoped, tag = 'internal scratch']
  #allocation2 [shape = 'f32[1,1]{1,0:T(1,128)S(6)}', space=smem, size = 0x200, scoped, tag = 'scoped memory for tpu_custom_call.1']
  %s0 = inlined_call_operand.<no memory space> [shape: f32[1,1], index: 0, kind: input, shape index: {}]
  %s1 = inlined_call_operand.vmem [shape: f32[8,1], index: 1, kind: input, shape index: {}]
  %s2 = inlined_call_operand.vmem [shape: f32[8,1], index: 2, kind: input, shape index: {}]
  %s3 = inlined_call_operand.vmem [shape: f32[8,128], index: 3, kind: input, shape index: {}]
  %s4 = inlined_call_operand.vmem [shape: f32[8,128], index: 4, kind: input, shape index: {}]
  %s5 = inlined_call_operand.hbm [shape: f32[8,128], index: 5, kind: output, shape index: {}]
  %s6 = sld [smem:[#allocation0]]
  $region30: #{tpu_custom_call.1} parent=0
    _
  %s8 = ssub.s32 1, %s6
  %s9 = scalar_select 0, %s8, %s6
  %10 = sst [smem:[#allocation2]] %s0
  $region1: #{tpu_custom_call.1} parent=0
    #allocation3 [shape = 'u8[4096]{0}', space=vmem, size = 0x1000, scoped, tag = 'output window, operand 0, single buffered']
    #allocation4 [shape = 's32[1]{0}', space=sflag, size = 0x4, scoped, tag = 'scoped memory for tpu_custom_call.1']
    %11 = vsyncpa [#allocation4], 0
    // Predicated region
    $region2: #{tpu_custom_call.1} parent=1 // pred_check
      _
    $region3: #{tpu_custom_call.1} parent=1 // pred_check_branch
      %13 = sbr.rel (0) target = $region5
    $region4: #{tpu_custom_call.1} parent=1 // pred_region
      _
    $region5: #{tpu_custom_call.1} parent=1 // pred_fallthru
      _
    // Predicated region
    $region6: #{tpu_custom_call.1} parent=1 // pred_check
      _
    $region7: #{tpu_custom_call.1} parent=1 // pred_check_branch
      %15 = sbr.rel (0) target = $region9
    $region8: #{tpu_custom_call.1} parent=1 // pred_region
      _
    $region9: #{tpu_custom_call.1} parent=1 // pred_fallthru
      _
    // Predicated region
    $region10: #{tpu_custom_call.1} parent=1 // pred_check
      _
    $region11: #{tpu_custom_call.1} parent=1 // pred_check_branch
      %17 = sbr.rel (0) target = $region13
    $region12: #{tpu_custom_call.1} parent=1 // pred_region
      _
    $region13: #{tpu_custom_call.1} parent=1 // pred_fallthru
      _
    // Predicated region
    $region14: #{tpu_custom_call.1} parent=1 // pred_check
      _
    $region15: #{tpu_custom_call.1} parent=1 // pred_check_branch
      %19 = sbr.rel (0) target = $region17
    $region16: #{tpu_custom_call.1} parent=1 // pred_region
      _
    $region17: #{tpu_custom_call.1} parent=1 // pred_fallthru
      _
    // Predicated region
    $region18: #{tpu_custom_call.1} parent=1 // pred_check
      _
    $region19: #{tpu_custom_call.1} parent=1 // pred_check_branch
      %21 = sbr.rel (0) target = $region21
    $region20: #{tpu_custom_call.1} parent=1 // pred_region
      _
    $region21: #{tpu_custom_call.1} parent=1 // pred_fallthru
      _
    %s22 = sld [smem:[#allocation2]]
    %v23 = vld [vmem:[%s1] sm:$0xff]
    %v24 = vstv %s22
    %v25 = vmul.f32 %v24, %v23
    %v26 = vld [vmem:[%s2] sm:$0xff]
    %v27 = vadd.f32 %v25, %v26
    %v28 = vld [vmem:[%s3] sm:$0xff]
    %30 = vset.pattern.permute.xlu0 0
    %31 = vperm.xlu0 %30, %v27
    %v32 = vpop.permute.xlu0 %31
    %v34 = vmul.f32 %v32, %v28
    %v35 = vrot.slane %v34, 4
    %v36 = vadd.f32 %v34, %v35
    %v37 = vrot.slane %v36, 2
    %v38 = vadd.f32 %v36, %v37
    %v39 = vrot.slane %v38, 1
    %v40 = vadd.f32 %v38, %v39
    %v41 = vld [vmem:[%s4] sm:$0xff]
    %v42 = vadd.f32 %v41, %v40
    %43 = vst [vmem:[#allocation3] sm:$0xff] %v42
    // Predicated region
    $region22: #{tpu_custom_call.1} parent=1 // pred_check
      _
    $region23: #{tpu_custom_call.1} parent=1 // pred_check_branch
      %45 = sbr.rel (0) target = $region25
    $region24: #{tpu_custom_call.1} parent=1 // pred_region
      %s47 = ssub.s32 128, 128
      %48 = vsyncadd [#allocation4], %s47
      %s50 = sshll.u32 [#allocation3], 4
      %s51 = int_to_ptr.vmem [resolvable:$true] %s50
      %53 = dma.vmem_to_hbm [thread:$0]  %s51, 128, %s5, [#allocation4]
    $region25: #{tpu_custom_call.1} parent=1 // pred_fallthru
      _
    // Predicated region
    $region26: #{tpu_custom_call.1} parent=1 // pred_check
      _
    $region27: #{tpu_custom_call.1} parent=1 // pred_check_branch
      %55 = sbr.rel (0) target = $region29
    $region28: #{tpu_custom_call.1} parent=1 // pred_region
      %56 = dma.done [#allocation4], 128
    $region29: #{tpu_custom_call.1} parent=1 // pred_fallthru
      _
    %57 = vsyncpa [#allocation4], 1

</llo_original>
